<compile_context>
chip_gen: v7x
topology: tpu7x:2x2x1
jax: 0.10.0
libtpu: 0.0.40
codegen_flags: <defaults>
</compile_context>

<pallas_src>
import functools

import numpy as np
import jax
import jax.numpy as jnp
from jax import lax
from jax.experimental import pallas as pl
from jax.experimental.pallas import tpu as pltpu


# ----------------------------------------------------------------------------
# Parameter setup (plain numpy glue): fold the variational circuit + observable
# into one matrix A_o per output channel.  Qubit q <-> bit q (little-endian).
# ----------------------------------------------------------------------------
def _ry(theta):
    c, s = np.cos(theta / 2.0), np.sin(theta / 2.0)
    return np.array([[c, -s], [s, c]], dtype=np.float64)


def build_channel_observables(weight, n_qubits):
    """weight: (out_channels, n_qubits, variational_layers) -> A: (O, D, D)."""
    out_channels, n, n_layers = weight.shape
    assert n == n_qubits
    D = 2 ** n_qubits

    def cnot(control, target):
        m = np.zeros((D, D), dtype=np.float64)
        for i in range(D):
            j = i ^ (1 << target) if (i >> control) & 1 else i
            m[j, i] = 1.0
        return m

    ring = np.eye(D)
    if n_qubits > 1:
        for q in range(n_qubits):
            ring = cnot(q, (q + 1) % n_qubits) @ ring

    parity = np.array([(-1.0) ** bin(i).count("1") for i in range(D)])  # Z^(x)n

    A = np.zeros((out_channels, D, D), dtype=np.float32)
    for o in range(out_channels):
        U = np.eye(D)
        for l in range(n_layers):
            layer = np.array([[1.0]])
            for q in range(n_qubits - 1, -1, -1):   # rightmost kron factor = qubit 0
                layer = np.kron(layer, _ry(weight[o, q, l]))
            U = ring @ layer @ U
        A[o] = (U.T @ (parity[:, None] * U)).astype(np.float32)
    return jnp.asarray(A)


# ----------------------------------------------------------------------------
# im2col (nn.Unfold with kernel (K,1)) -- pure data rearrangement glue.
# ----------------------------------------------------------------------------
def im2col_1d(x, kernel_size, dilation=1, padding=0, stride=1):
    N, C, L = x.shape
    xp = jnp.pad(x, ((0, 0), (0, 0), (padding, padding)))
    Lp = L + 2 * padding
    L_out = (Lp - dilation * (kernel_size - 1) - 1) // stride + 1
    starts = jnp.arange(L_out) * stride
    offs = jnp.arange(kernel_size) * dilation
    idx = starts[:, None] + offs[None, :]          # (L_out, K)
    patches = xp[:, :, idx]                        # (N, C, L_out, K)
    patches = jnp.transpose(patches, (0, 2, 1, 3)) # (N, L_out, C, K)
    return patches.reshape(N, L_out, C * kernel_size)  # feature idx = c*K + k


# ----------------------------------------------------------------------------
# Pallas kernel.  All big arrays keep the sample index (tm) on the 128-lane
# axis; the statevector dim D and the fused channel dim O*D live on sublanes.
#   xT_ref : (n_qubits, tm)  f32
#   a_ref  : (O*D, D)        bf16   a_ref[o*D + e, d] = A[o, d, e]
#   o_ref  : (O, tm)         f32
# ----------------------------------------------------------------------------
def _qnn_kernel(xT_ref, a_ref, o_ref, *, n_qubits, out_channels, D):
    tm = xT_ref.shape[1]
    half = xT_ref[...] * 0.5                       # (n_qubits, tm)
    cosv = jnp.cos(half)
    sinv = jnp.sin(half)

    # product-state encoding amplitudes; basis-state index along sublanes
    state = lax.broadcasted_iota(jnp.int32, (D, tm), 0)
    psiT = jnp.ones((D, tm), dtype=jnp.float32)
    for q in range(n_qubits):                      # static, n_qubits is small
        bit = (state >> q) & 1
        psiT = psiT * jnp.where(bit == 0, cosv[q:q + 1, :], sinv[q:q + 1, :])

    # one fused MXU matmul for ALL output channels:
    #   (O*D, D) @ (D, tm) -> (O*D, tm), bf16 inputs, f32 accumulation.
    tT = jnp.dot(a_ref[...], psiT.astype(jnp.bfloat16),
                 preferred_element_type=jnp.float32)

    # per-channel psi-weighted reduction over the state dim (sublane groups of D);
    # each store is a full-lane-width (tm) row -> no lane-masked partial stores.
    for o in range(out_channels):                  # static unrolled, O is small
        o_ref[o, :] = jnp.sum(tT[o * D:(o + 1) * D, :] * psiT, axis=0)


def qnn_forward_pallas(x_flat, A, tm=256):
    """x_flat: (M, n_qubits) f32, A: (O, D, D) f32 -> (O, M) f32."""
    M, n_qubits = x_flat.shape
    O, D, _ = A.shape
    assert D == 2 ** n_qubits

    # Lane-dense, kernel-ready operands (host/wrapper-side plumbing):
    #   A_lhs[o*D + e, d] = A[o, d, e]   (A_o is symmetric, but stay explicit)
    A_lhs = jnp.transpose(A, (0, 2, 1)).reshape(O * D, D).astype(jnp.bfloat16)

    # tile size: multiple of 128 lanes, clamped so tiny inputs aren't over-padded
    tm = ((tm + 127) // 128) * 128
    tm = max(128, min(tm, ((M + 127) // 128) * 128))
    m_pad = ((M + tm - 1) // tm) * tm
    xT = jnp.pad(x_flat, ((0, m_pad - M), (0, 0))).T     # (n_qubits, m_pad)

    kernel = functools.partial(_qnn_kernel, n_qubits=n_qubits,
                               out_channels=O, D=D)
    out = pl.pallas_call(
        kernel,
        out_shape=jax.ShapeDtypeStruct((O, m_pad), jnp.float32),
        grid_spec=pltpu.PrefetchScalarGridSpec(
            num_scalar_prefetch=0,
            grid=(m_pad // tm,),
            in_specs=[
                pl.BlockSpec((n_qubits, tm), lambda i: (0, i)),
                pl.BlockSpec((O * D, D), lambda i: (0, 0)),   # resident, loaded once
            ],
            out_specs=pl.BlockSpec((O, tm), lambda i: (0, i)),
        ),
        compiler_params=pltpu.CompilerParams(
            dimension_semantics=("parallel",)),
    )(xT, A_lhs)
    return out[:, :M]                                     # (O, M)


def qnn_forward_ref(x_flat, A):
    """Pure-JAX f32 reference of the same math -> (O, M)."""
    M, n = x_flat.shape
    D = A.shape[-1]
    half = x_flat * 0.5
    bits = (jnp.arange(D)[None, :] >> jnp.arange(n)[:, None]) & 1     # (n, D)
    fac = jnp.where(bits[None, :, :] == 0,
                    jnp.cos(half)[:, :, None], jnp.sin(half)[:, :, None])
    psi = jnp.prod(fac, axis=1)                                       # (M, D)
    return jnp.einsum('md,ode,me->om', psi, A, psi,
                      precision=lax.Precision.HIGHEST)


# ----------------------------------------------------------------------------
# QConv1D forward
# ----------------------------------------------------------------------------
def qconv1d_forward(x, A, kernel_size, dilation=1, padding=0, stride=1,
                    use_pallas=True):
    N, C, L = x.shape
    patches = im2col_1d(x, kernel_size, dilation, padding, stride)  # (N, L_out, C*K)
    L_out = patches.shape[1]
    flat = patches.reshape(N * L_out, C * kernel_size)
    qnn = qnn_forward_pallas if use_pallas else qnn_forward_ref
    out = qnn(flat, A)                                    # (O, N*L_out)
    out = out.reshape(A.shape[0], N, L_out)               # (O, N, L_out)
    return jnp.transpose(out, (1, 0, 2))                  # (N, O, L_out)


if __name__ == "__main__":
    # small shapes consistent with the module
    C = 2                              # in_channels
    K, O, VL = 3, 4, 2                 # kernel_size, out_channels, variational_layers
    stride, padding, dilation = 1, 0, 1
    n_qubits = C * K                   # 6 qubits -> statevector dim 64

    key = jax.random.PRNGKey(0)
    kx1, kx2, kw = jax.random.split(key, 3)
    # matches nn.Parameter(torch.randn(out_features, in_features, variational_layers))
    weight = jax.random.normal(kw, (O, n_qubits, VL), dtype=jnp.float32)
    A = build_channel_observables(np.asarray(weight), n_qubits)   # (O, 64, 64)

    ok = True
    for kx, (N, L) in ((kx1, (2, 16)), (kx2, (2, 160))):   # 2nd case: grid > 1 + padding
        x = jax.random.normal(kx, (N, C, L), dtype=jnp.float32)

        out = qconv1d_forward(x, A, K, dilation, padding, stride, use_pallas=True)
        out = jax.block_until_ready(out)

        L_out = (L + 2 * padding - dilation * (K - 1) - 1) // stride + 1
        assert out.shape == (N, O, L_out), out.shape

        ref = qconv1d_forward(x, A, K, dilation, padding, stride, use_pallas=False)
        # bf16 MXU inputs / f32 accumulation in the kernel vs f32 HIGHEST reference
        np.testing.assert_allclose(np.asarray(out), np.asarray(ref),
                                   rtol=1e-2, atol=1e-2)

    if ok:
        print("KERNEL_OK")
</pallas_src>

<mosaic_0001>
module attributes {stable_mosaic.version = 11 : i64} {
  func.func @_qnn_kernel(%arg0: i32, %arg1: memref<6x128xf32, #tpu.memory_space<vmem>>, %arg2: memref<256x64xbf16, #tpu.memory_space<vmem>>, %arg3: memref<4x128xf32, #tpu.memory_space<vmem>>) attributes {dimension_semantics = [#tpu.dimension_semantics<parallel>], iteration_bounds = array<i64: 1>, scalar_prefetch = 0 : i64, scratch_operands = 0 : i64, tpu.core_type = #tpu.core_type<tc>, window_params = [{transform_indices = @transform_0, window_bounds = array<i64: 6, 128>}, {pipeline_mode = #tpu.pipeline_mode<synchronous>, transform_indices = @transform_1, window_bounds = array<i64: 256, 64>}, {transform_indices = @transform_2, window_bounds = array<i64: 4, 128>}]} {
    %c0 = arith.constant 0 : index
    %c0_0 = arith.constant 0 : index
    %0 = vector.load %arg1[%c0, %c0_0] : memref<6x128xf32, #tpu.memory_space<vmem>>, vector<6x128xf32>
    %cst = arith.constant 5.000000e-01 : f32
    %1 = vector.broadcast %cst : f32 to vector<6x128xf32>
    %2 = arith.mulf %0, %1 : vector<6x128xf32>
    %3 = math.cos %2 : vector<6x128xf32>
    %4 = math.sin %2 : vector<6x128xf32>
    %5 = tpu.iota {dimensions = array<i32: 0>} : vector<64x128xi32>
    %cst_1 = arith.constant 1.000000e+00 : f32
    %6 = vector.broadcast %cst_1 : f32 to vector<64x128xf32>
    %c0_i32 = arith.constant 0 : i32
    %7 = vector.broadcast %c0_i32 : i32 to vector<64x128xi32>
    %8 = arith.shrsi %5, %7 : vector<64x128xi32>
    %c1_i32 = arith.constant 1 : i32
    %9 = vector.broadcast %c1_i32 : i32 to vector<64x128xi32>
    %10 = arith.andi %8, %9 : vector<64x128xi32>
    %c0_i32_2 = arith.constant 0 : i32
    %11 = vector.broadcast %c0_i32_2 : i32 to vector<64x128xi32>
    %12 = arith.cmpi eq, %10, %11 : vector<64x128xi32>
    %13 = vector.extract_strided_slice %3 {offsets = [0, 0], sizes = [1, 128], strides = [1, 1]} : vector<6x128xf32> to vector<1x128xf32>
    %14 = vector.extract_strided_slice %4 {offsets = [0, 0], sizes = [1, 128], strides = [1, 1]} : vector<6x128xf32> to vector<1x128xf32>
    %15 = vector.shape_cast %13 : vector<1x128xf32> to vector<1x128xf32>
    %16 = vector.broadcast %15 : vector<1x128xf32> to vector<64x128xf32>
    %17 = vector.shape_cast %14 : vector<1x128xf32> to vector<1x128xf32>
    %18 = vector.broadcast %17 : vector<1x128xf32> to vector<64x128xf32>
    %19 = arith.select %12, %16, %18 : vector<64x128xi1>, vector<64x128xf32>
    %20 = arith.mulf %6, %19 : vector<64x128xf32>
    %c1_i32_3 = arith.constant 1 : i32
    %21 = vector.broadcast %c1_i32_3 : i32 to vector<64x128xi32>
    %22 = arith.shrsi %5, %21 : vector<64x128xi32>
    %c1_i32_4 = arith.constant 1 : i32
    %23 = vector.broadcast %c1_i32_4 : i32 to vector<64x128xi32>
    %24 = arith.andi %22, %23 : vector<64x128xi32>
    %c0_i32_5 = arith.constant 0 : i32
    %25 = vector.broadcast %c0_i32_5 : i32 to vector<64x128xi32>
    %26 = arith.cmpi eq, %24, %25 : vector<64x128xi32>
    %27 = vector.extract_strided_slice %3 {offsets = [1, 0], sizes = [1, 128], strides = [1, 1]} : vector<6x128xf32> to vector<1x128xf32>
    %28 = vector.extract_strided_slice %4 {offsets = [1, 0], sizes = [1, 128], strides = [1, 1]} : vector<6x128xf32> to vector<1x128xf32>
    %29 = vector.shape_cast %27 : vector<1x128xf32> to vector<1x128xf32>
    %30 = vector.broadcast %29 : vector<1x128xf32> to vector<64x128xf32>
    %31 = vector.shape_cast %28 : vector<1x128xf32> to vector<1x128xf32>
    %32 = vector.broadcast %31 : vector<1x128xf32> to vector<64x128xf32>
    %33 = arith.select %26, %30, %32 : vector<64x128xi1>, vector<64x128xf32>
    %34 = arith.mulf %20, %33 : vector<64x128xf32>
    %c2_i32 = arith.constant 2 : i32
    %35 = vector.broadcast %c2_i32 : i32 to vector<64x128xi32>
    %36 = arith.shrsi %5, %35 : vector<64x128xi32>
    %c1_i32_6 = arith.constant 1 : i32
    %37 = vector.broadcast %c1_i32_6 : i32 to vector<64x128xi32>
    %38 = arith.andi %36, %37 : vector<64x128xi32>
    %c0_i32_7 = arith.constant 0 : i32
    %39 = vector.broadcast %c0_i32_7 : i32 to vector<64x128xi32>
    %40 = arith.cmpi eq, %38, %39 : vector<64x128xi32>
    %41 = vector.extract_strided_slice %3 {offsets = [2, 0], sizes = [1, 128], strides = [1, 1]} : vector<6x128xf32> to vector<1x128xf32>
    %42 = vector.extract_strided_slice %4 {offsets = [2, 0], sizes = [1, 128], strides = [1, 1]} : vector<6x128xf32> to vector<1x128xf32>
    %43 = vector.shape_cast %41 : vector<1x128xf32> to vector<1x128xf32>
    %44 = vector.broadcast %43 : vector<1x128xf32> to vector<64x128xf32>
    %45 = vector.shape_cast %42 : vector<1x128xf32> to vector<1x128xf32>
    %46 = vector.broadcast %45 : vector<1x128xf32> to vector<64x128xf32>
    %47 = arith.select %40, %44, %46 : vector<64x128xi1>, vector<64x128xf32>
    %48 = arith.mulf %34, %47 : vector<64x128xf32>
    %c3_i32 = arith.constant 3 : i32
    %49 = vector.broadcast %c3_i32 : i32 to vector<64x128xi32>
    %50 = arith.shrsi %5, %49 : vector<64x128xi32>
    %c1_i32_8 = arith.constant 1 : i32
    %51 = vector.broadcast %c1_i32_8 : i32 to vector<64x128xi32>
    %52 = arith.andi %50, %51 : vector<64x128xi32>
    %c0_i32_9 = arith.constant 0 : i32
    %53 = vector.broadcast %c0_i32_9 : i32 to vector<64x128xi32>
    %54 = arith.cmpi eq, %52, %53 : vector<64x128xi32>
    %55 = vector.extract_strided_slice %3 {offsets = [3, 0], sizes = [1, 128], strides = [1, 1]} : vector<6x128xf32> to vector<1x128xf32>
    %56 = vector.extract_strided_slice %4 {offsets = [3, 0], sizes = [1, 128], strides = [1, 1]} : vector<6x128xf32> to vector<1x128xf32>
    %57 = vector.shape_cast %55 : vector<1x128xf32> to vector<1x128xf32>
    %58 = vector.broadcast %57 : vector<1x128xf32> to vector<64x128xf32>
    %59 = vector.shape_cast %56 : vector<1x128xf32> to vector<1x128xf32>
    %60 = vector.broadcast %59 : vector<1x128xf32> to vector<64x128xf32>
    %61 = arith.select %54, %58, %60 : vector<64x128xi1>, vector<64x128xf32>
    %62 = arith.mulf %48, %61 : vector<64x128xf32>
    %c4_i32 = arith.constant 4 : i32
    %63 = vector.broadcast %c4_i32 : i32 to vector<64x128xi32>
    %64 = arith.shrsi %5, %63 : vector<64x128xi32>
    %c1_i32_10 = arith.constant 1 : i32
    %65 = vector.broadcast %c1_i32_10 : i32 to vector<64x128xi32>
    %66 = arith.andi %64, %65 : vector<64x128xi32>
    %c0_i32_11 = arith.constant 0 : i32
    %67 = vector.broadcast %c0_i32_11 : i32 to vector<64x128xi32>
    %68 = arith.cmpi eq, %66, %67 : vector<64x128xi32>
    %69 = vector.extract_strided_slice %3 {offsets = [4, 0], sizes = [1, 128], strides = [1, 1]} : vector<6x128xf32> to vector<1x128xf32>
    %70 = vector.extract_strided_slice %4 {offsets = [4, 0], sizes = [1, 128], strides = [1, 1]} : vector<6x128xf32> to vector<1x128xf32>
    %71 = vector.shape_cast %69 : vector<1x128xf32> to vector<1x128xf32>
    %72 = vector.broadcast %71 : vector<1x128xf32> to vector<64x128xf32>
    %73 = vector.shape_cast %70 : vector<1x128xf32> to vector<1x128xf32>
    %74 = vector.broadcast %73 : vector<1x128xf32> to vector<64x128xf32>
    %75 = arith.select %68, %72, %74 : vector<64x128xi1>, vector<64x128xf32>
    %76 = arith.mulf %62, %75 : vector<64x128xf32>
    %c5_i32 = arith.constant 5 : i32
    %77 = vector.broadcast %c5_i32 : i32 to vector<64x128xi32>
    %78 = arith.shrsi %5, %77 : vector<64x128xi32>
    %c1_i32_12 = arith.constant 1 : i32
    %79 = vector.broadcast %c1_i32_12 : i32 to vector<64x128xi32>
    %80 = arith.andi %78, %79 : vector<64x128xi32>
    %c0_i32_13 = arith.constant 0 : i32
    %81 = vector.broadcast %c0_i32_13 : i32 to vector<64x128xi32>
    %82 = arith.cmpi eq, %80, %81 : vector<64x128xi32>
    %83 = vector.extract_strided_slice %3 {offsets = [5, 0], sizes = [1, 128], strides = [1, 1]} : vector<6x128xf32> to vector<1x128xf32>
    %84 = vector.extract_strided_slice %4 {offsets = [5, 0], sizes = [1, 128], strides = [1, 1]} : vector<6x128xf32> to vector<1x128xf32>
    %85 = vector.shape_cast %83 : vector<1x128xf32> to vector<1x128xf32>
    %86 = vector.broadcast %85 : vector<1x128xf32> to vector<64x128xf32>
    %87 = vector.shape_cast %84 : vector<1x128xf32> to vector<1x128xf32>
    %88 = vector.broadcast %87 : vector<1x128xf32> to vector<64x128xf32>
    %89 = arith.select %82, %86, %88 : vector<64x128xi1>, vector<64x128xf32>
    %90 = arith.mulf %76, %89 : vector<64x128xf32>
    %c0_14 = arith.constant 0 : index
    %c0_15 = arith.constant 0 : index
    %91 = vector.load %arg2[%c0_14, %c0_15] : memref<256x64xbf16, #tpu.memory_space<vmem>>, vector<256x64xbf16>
    %92 = arith.truncf %90 : vector<64x128xf32> to vector<64x128xbf16>
    %cst_16 = arith.constant dense<0.000000e+00> : vector<256x128xf32>
    %93 = tpu.matmul %91, %92, %cst_16 {dimension_numbers = #tpu.dot_dimension_numbers<[1], [0], [0], [1], [0, 0, 1, 1], [], []>} : vector<256x64xbf16>, vector<64x128xbf16>, vector<256x128xf32> -> vector<256x128xf32>
    %94 = vector.extract_strided_slice %93 {offsets = [0, 0], sizes = [64, 128], strides = [1, 1]} : vector<256x128xf32> to vector<64x128xf32>
    %95 = arith.mulf %94, %90 : vector<64x128xf32>
    %cst_17 = arith.constant dense<0.000000e+00> : vector<128xf32>
    %96 = vector.multi_reduction <add>, %95, %cst_17 [0] : vector<64x128xf32> to vector<128xf32>
    %c0_18 = arith.constant 0 : index
    %c0_19 = arith.constant 0 : index
    %97 = vector.load %arg3[%c0_18, %c0_19] : memref<4x128xf32, #tpu.memory_space<vmem>>, vector<1x128xf32>
    %98 = vector.shape_cast %97 : vector<1x128xf32> to vector<128xf32>
    %99 = vector.shape_cast %96 : vector<128xf32> to vector<1x128xf32>
    tpu.vector_store %arg3[%c0_18, %c0_19], %99 {strides = array<i32>} : memref<4x128xf32, #tpu.memory_space<vmem>>, vector<1x128xf32>,
    %100 = vector.extract_strided_slice %93 {offsets = [64, 0], sizes = [64, 128], strides = [1, 1]} : vector<256x128xf32> to vector<64x128xf32>
    %101 = arith.mulf %100, %90 : vector<64x128xf32>
    %cst_20 = arith.constant dense<0.000000e+00> : vector<128xf32>
    %102 = vector.multi_reduction <add>, %101, %cst_20 [0] : vector<64x128xf32> to vector<128xf32>
    %c1 = arith.constant 1 : index
    %c0_21 = arith.constant 0 : index
    %103 = vector.load %arg3[%c1, %c0_21] : memref<4x128xf32, #tpu.memory_space<vmem>>, vector<1x128xf32>
    %104 = vector.shape_cast %103 : vector<1x128xf32> to vector<128xf32>
    %105 = vector.shape_cast %102 : vector<128xf32> to vector<1x128xf32>
    tpu.vector_store %arg3[%c1, %c0_21], %105 {strides = array<i32>} : memref<4x128xf32, #tpu.memory_space<vmem>>, vector<1x128xf32>,
    %106 = vector.extract_strided_slice %93 {offsets = [128, 0], sizes = [64, 128], strides = [1, 1]} : vector<256x128xf32> to vector<64x128xf32>
    %107 = arith.mulf %106, %90 : vector<64x128xf32>
    %cst_22 = arith.constant dense<0.000000e+00> : vector<128xf32>
    %108 = vector.multi_reduction <add>, %107, %cst_22 [0] : vector<64x128xf32> to vector<128xf32>
    %c2 = arith.constant 2 : index
    %c0_23 = arith.constant 0 : index
    %109 = vector.load %arg3[%c2, %c0_23] : memref<4x128xf32, #tpu.memory_space<vmem>>, vector<1x128xf32>
    %110 = vector.shape_cast %109 : vector<1x128xf32> to vector<128xf32>
    %111 = vector.shape_cast %108 : vector<128xf32> to vector<1x128xf32>
    tpu.vector_store %arg3[%c2, %c0_23], %111 {strides = array<i32>} : memref<4x128xf32, #tpu.memory_space<vmem>>, vector<1x128xf32>,
    %112 = vector.extract_strided_slice %93 {offsets = [192, 0], sizes = [64, 128], strides = [1, 1]} : vector<256x128xf32> to vector<64x128xf32>
    %113 = arith.mulf %112, %90 : vector<64x128xf32>
    %cst_24 = arith.constant dense<0.000000e+00> : vector<128xf32>
    %114 = vector.multi_reduction <add>, %113, %cst_24 [0] : vector<64x128xf32> to vector<128xf32>
    %c3 = arith.constant 3 : index
    %c0_25 = arith.constant 0 : index
    %115 = vector.load %arg3[%c3, %c0_25] : memref<4x128xf32, #tpu.memory_space<vmem>>, vector<1x128xf32>
    %116 = vector.shape_cast %115 : vector<1x128xf32> to vector<128xf32>
    %117 = vector.shape_cast %114 : vector<128xf32> to vector<1x128xf32>
    tpu.vector_store %arg3[%c3, %c0_25], %117 {strides = array<i32>} : memref<4x128xf32, #tpu.memory_space<vmem>>, vector<1x128xf32>,
    return
  }
  func.func @transform_0(%arg0: i32) -> (i32, i32) {
    %c0_i32 = arith.constant 0 : i32
    %c0_i32_0 = arith.constant 0 : i32
    return %c0_i32, %arg0 : i32, i32
  }
  func.func @transform_1(%arg0: i32) -> (i32, i32) {
    %c0_i32 = arith.constant 0 : i32
    %c0_i32_0 = arith.constant 0 : i32
    %c0_i32_1 = arith.constant 0 : i32
    return %c0_i32, %c0_i32_0 : i32, i32
  }
  func.func @transform_2(%arg0: i32) -> (i32, i32) {
    %c0_i32 = arith.constant 0 : i32
    %c0_i32_0 = arith.constant 0 : i32
    return %c0_i32, %arg0 : i32, i32
  }
}

</mosaic_0001>

<llo_original>
// kernel: tpu_custom_call.1
$region0: #{tpu_custom_call.1}
  #allocation0 [shape = 'u32[]', space=smem, size = 0x4, offset = 0x4, fixed_abs, tag = 'smem constant byte address 0x4 - core index']
  #allocation1 [shape = 'u32[144,128]{1,0:T(1,128)}', space=vmem, size = 0x12000, scoped, tag = 'internal scratch']
  %s0 = inlined_call_operand.vmem [shape: f32[6,128], index: 0, kind: input, shape index: {}]
  %s1 = inlined_call_operand.vmem [shape: bf16[256,64], index: 1, kind: input, shape index: {}]
  %s2 = inlined_call_operand.hbm [shape: f32[4,128], index: 2, kind: output, shape index: {}]
  %s3 = sld [smem:[#allocation0]]
  $region18: #{tpu_custom_call.1} parent=0
    _
  %s5 = ssub.s32 1, %s3
  %s6 = scalar_select 0, %s5, %s3
  $region1: #{tpu_custom_call.1} parent=0
    #allocation2 [shape = 'u8[2048]{0}', space=vmem, size = 0x800, scoped, tag = 'output window, operand 0, single buffered']
    #allocation3 [shape = 's32[1]{0}', space=sflag, size = 0x4, scoped, tag = 'scoped memory for tpu_custom_call.1']
    %7 = vsyncpa [#allocation3], 0
    // Predicated region
    $region2: #{tpu_custom_call.1} parent=1 // pred_check
      _
    $region3: #{tpu_custom_call.1} parent=1 // pred_check_branch
      %9 = sbr.rel (0) target = $region5
    $region4: #{tpu_custom_call.1} parent=1 // pred_region
      _
    $region5: #{tpu_custom_call.1} parent=1 // pred_fallthru
      _
    // Predicated region
    $region6: #{tpu_custom_call.1} parent=1 // pred_check
      _
    $region7: #{tpu_custom_call.1} parent=1 // pred_check_branch
      %11 = sbr.rel (0) target = $region9
    $region8: #{tpu_custom_call.1} parent=1 // pred_region
      _
    $region9: #{tpu_custom_call.1} parent=1 // pred_fallthru
      _
    %v13 = vld [vmem:[%s0] sm:$0x3f]
    %v14 = vmul.f32 %v13, 0.5
    %v15 = vand.u32 2147483647, %v14
    %vm16 = vcmp.le.f32.partialorder %v15, 0.7853982
    %vm17 = vcmp.lt.s32.totalorder %v14, 0
    %v18 = vand.u32 %v14, 2139095040
    %v19 = vshrl.u32 %v18, 23
    %v20 = vsub.s32 %v19, 127
    %v21 = vand.u32 2147483647, %v14
    %v22 = vand.u32 %v21, 8388607
    %v23 = vor.u32 %v22, 8388608
    %v24 = vsub.s32 0, %v23
    %v25 = vadd.s32 %v20, 1
    %vm26 = vcmp.gt.s32.totalorder %v25, 0
    %v27 = vsel %vm26, %v25, 0
    %v28 = vshrl.u32 %v27, 5
    %v29 = vand.u32 %v27, 31
    %v30 = vsub.s32 32, %v29
    %v31 = vshrl.u32 683565275, %v30
    %v32 = vshll.u32 683565275, %v29
    %v33 = vshrl.u32 2475754826, %v30
    %v34 = vor.u32 %v32, %v33
    %v35 = vshll.u32 2475754826, %v29
    %v36 = vshrl.u32 2131351028, %v30
    %v37 = vor.u32 %v35, %v36
    %v38 = vshll.u32 2131351028, %v29
    %v39 = vshrl.u32 2102212464, %v30
    %v40 = vor.u32 %v38, %v39
    %v41 = vshll.u32 2102212464, %v29
    %v42 = vshrl.u32 920167782, %v30
    %v43 = vor.u32 %v41, %v42
    %v44 = vshll.u32 920167782, %v29
    %v45 = vshrl.u32 1326507024, %v30
    %v46 = vor.u32 %v44, %v45
    %vm47 = vcmp.lt.s32.totalorder %v28, 1
    %vm48 = vcmp.lt.s32.totalorder %v28, 2
    %vm49 = vcmp.lt.s32.totalorder %v28, 3
    %vm50 = vcmp.lt.s32.totalorder %v28, 4
    %v51 = vsel %vm47, %v31, %v34
    %v52 = vsel %vm50, %v40, 2102212464
    %v53 = vsel %vm49, %v37, %v52
    %v54 = vsel %vm48, %v51, %v53
    %v55 = vsel %vm47, %v34, %v37
    %v56 = vsel %vm50, %v43, 920167782
    %v57 = vsel %vm49, %v40, %v56
    %v58 = vsel %vm48, %v55, %v57
    %v59 = vsel %vm47, %v37, %v40
    %v60 = vsel %vm50, %v46, 1326507024
    %v61 = vsel %vm49, %v43, %v60
    %v62 = vsel %vm48, %v59, %v61
    %v63 = vshll.u32 %v23, 8
    %v64 = vmul.u32.u64.compose %v63, %v62
    %v65 = vextract.low.u32 %v64
    %v66 = vextract.high.u32 %v64
    %v67 = vmul.u32.u64.compose %v63, %v58
    %v68 = vextract.low.u32 %v67
    %v69 = vextract.high.u32 %v67
    %v70 = vmul.u32 %v63, %v54
    %v71 = vadd.s32 %v66, %v68
    %vm72 = vc.u32 %v66, %v68
    %v73 = vadd.s32 %v69, 1
    %v74 = vsel %vm72, %v73, %v69
    %v75 = vadd.s32 %v70, %v74
    %v76 = vadd.s32 %v75, 536870912
    %v77 = vshrl.u32 %v76, 30
    %v78 = vshll.u32 %v77, 30
    %v79 = vsub.s32 %v75, %v78
    %vm80 = vcmp.lt.s32.totalorder %v79, 0
    %v81 = vsub.s32 0, %v79
    %v82 = vsel %vm80, %v81, %v79
    %v83 = vclz %v82
    %v84 = vsub.s32 %v83, 2
    %vm85 = vcmp.gt.s32.totalorder 0, %v84
    %v86 = vsel %vm85, 0, %v84
    %v87 = vsub.s32 32, %v86
    %v88 = vshll.u32 %v79, %v86
    %v89 = vshrl.u32 %v71, %v87
    %v90 = vor.u32 %v88, %v89
    %v91 = vsub.s32 4294967266, %v86
    %v92 = vadd.s32 %v91, 127
    %v93 = vshll.u32 %v92, 23
    %v94 = vor.u32 4788187, %v93
    %v95 = vand.u32 2147483647, %v94
    %v97 = vcvt.s32.f32 %v90
    %v98 = vmul.f32 %v97, %v95
    %v99 = vxor.u32 %v98, 2147483648
    %v100 = vsel %vm17, %v99, %v98
    %v101 = vsub.s32 4, %v77
    %v102 = vsel %vm17, %v101, %v77
    %v103 = vsel %vm16, %v14, %v100
    %v104 = vsel %vm16, 0, %v102
    %v105 = vcosq.f32.pop %v103
    %v106 = vsinq.f32.pop %v103
    %vm107 = vweird.f32 %v14
    %v108 = vand.u32 %v104, 3
    %vm109 = vcmp.lt.s32.totalorder %v108, 2
    %vm110 = vcmp.eq.s32.totalorder %v108, 0
    %v111 = vxor.u32 %v106, 2147483648
    %v112 = vsel %vm110, %v105, %v111
    %vm113 = vcmp.eq.s32.totalorder %v108, 2
    %v114 = vxor.u32 %v105, 2147483648
    %v115 = vsel %vm113, %v114, %v106
    %v116 = vsel %vm109, %v112, %v115
    %v117 = vsel %vm107, nan, %v116
    %v118 = vand.u32 2147483647, %v14
    %vm119 = vcmp.le.f32.partialorder %v118, 0.7853982
    %vm120 = vcmp.lt.s32.totalorder %v14, 0
    %v121 = vand.u32 %v14, 2139095040
    %v122 = vshrl.u32 %v121, 23
    %v123 = vsub.s32 %v122, 127
    %v124 = vand.u32 2147483647, %v14
    %v125 = vand.u32 %v124, 8388607
    %v126 = vor.u32 %v125, 8388608
    %v127 = vsub.s32 0, %v126
    %v128 = vadd.s32 %v123, 1
    %vm129 = vcmp.gt.s32.totalorder %v128, 0
    %v130 = vsel %vm129, %v128, 0
    %v131 = vshrl.u32 %v130, 5
    %v132 = vand.u32 %v130, 31
    %v133 = vsub.s32 32, %v132
    %v134 = vshrl.u32 683565275, %v133
    %v135 = vshll.u32 683565275, %v132
    %v136 = vshrl.u32 2475754826, %v133
    %v137 = vor.u32 %v135, %v136
    %v138 = vshll.u32 2475754826, %v132
    %v139 = vshrl.u32 2131351028, %v133
    %v140 = vor.u32 %v138, %v139
    %v141 = vshll.u32 2131351028, %v132
    %v142 = vshrl.u32 2102212464, %v133
    %v143 = vor.u32 %v141, %v142
    %v144 = vshll.u32 2102212464, %v132
    %v145 = vshrl.u32 920167782, %v133
    %v146 = vor.u32 %v144, %v145
    %v147 = vshll.u32 920167782, %v132
    %v148 = vshrl.u32 1326507024, %v133
    %v149 = vor.u32 %v147, %v148
    %vm150 = vcmp.lt.s32.totalorder %v131, 1
    %vm151 = vcmp.lt.s32.totalorder %v131, 2
    %vm152 = vcmp.lt.s32.totalorder %v131, 3
    %vm153 = vcmp.lt.s32.totalorder %v131, 4
    %v154 = vsel %vm150, %v134, %v137
    %v155 = vsel %vm153, %v143, 2102212464
    %v156 = vsel %vm152, %v140, %v155
    %v157 = vsel %vm151, %v154, %v156
    %v158 = vsel %vm150, %v137, %v140
    %v159 = vsel %vm153, %v146, 920167782
    %v160 = vsel %vm152, %v143, %v159
    %v161 = vsel %vm151, %v158, %v160
    %v162 = vsel %vm150, %v140, %v143
    %v163 = vsel %vm153, %v149, 1326507024
    %v164 = vsel %vm152, %v146, %v163
    %v165 = vsel %vm151, %v162, %v164
    %v166 = vshll.u32 %v126, 8
    %v167 = vmul.u32.u64.compose %v166, %v165
    %v168 = vextract.low.u32 %v167
    %v169 = vextract.high.u32 %v167
    %v170 = vmul.u32.u64.compose %v166, %v161
    %v171 = vextract.low.u32 %v170
    %v172 = vextract.high.u32 %v170
    %v173 = vmul.u32 %v166, %v157
    %v174 = vadd.s32 %v169, %v171
    %vm175 = vc.u32 %v169, %v171
    %v176 = vadd.s32 %v172, 1
    %v177 = vsel %vm175, %v176, %v172
    %v178 = vadd.s32 %v173, %v177
    %v179 = vadd.s32 %v178, 536870912
    %v180 = vshrl.u32 %v179, 30
    %v181 = vshll.u32 %v180, 30
    %v182 = vsub.s32 %v178, %v181
    %vm183 = vcmp.lt.s32.totalorder %v182, 0
    %v184 = vsub.s32 0, %v182
    %v185 = vsel %vm183, %v184, %v182
    %v186 = vclz %v185
    %v187 = vsub.s32 %v186, 2
    %vm188 = vcmp.gt.s32.totalorder 0, %v187
    %v189 = vsel %vm188, 0, %v187
    %v190 = vsub.s32 32, %v189
    %v191 = vshll.u32 %v182, %v189
    %v192 = vshrl.u32 %v174, %v190
    %v193 = vor.u32 %v191, %v192
    %v194 = vsub.s32 4294967266, %v189
    %v195 = vadd.s32 %v194, 127
    %v196 = vshll.u32 %v195, 23
    %v197 = vor.u32 4788187, %v196
    %v198 = vand.u32 2147483647, %v197
    %v200 = vcvt.s32.f32 %v193
    %v201 = vmul.f32 %v200, %v198
    %v202 = vxor.u32 %v201, 2147483648
    %v203 = vsel %vm120, %v202, %v201
    %v204 = vsub.s32 4, %v180
    %v205 = vsel %vm120, %v204, %v180
    %v206 = vsel %vm119, %v14, %v203
    %v207 = vsel %vm119, 0, %v205
    %v208 = vcosq.f32.pop %v206
    %v209 = vsinq.f32.pop %v206
    %vm210 = vweird.f32 %v14
    %v211 = vadd.s32 %v207, 3
    %v212 = vand.u32 %v211, 3
    %vm213 = vcmp.lt.s32.totalorder %v212, 2
    %vm214 = vcmp.eq.s32.totalorder %v212, 0
    %v215 = vxor.u32 %v209, 2147483648
    %v216 = vsel %vm214, %v208, %v215
    %vm217 = vcmp.eq.s32.totalorder %v212, 2
    %v218 = vxor.u32 %v208, 2147483648
    %v219 = vsel %vm217, %v218, %v209
    %v220 = vsel %vm213, %v216, %v219
    %v221 = vsel %vm210, nan, %v220
    %v222 = vlaneseq
    %v223 = vshrl.u32 %v222, 7
    %v224 = vadd.s32 %v223, 8
    %v225 = vadd.s32 %v223, 16
    %v226 = vadd.s32 %v223, 24
    %v227 = vadd.s32 %v223, 32
    %v228 = vadd.s32 %v223, 40
    %v229 = vadd.s32 %v223, 48
    %v230 = vadd.s32 %v223, 56
    %v231 = vand.u32 %v223, 1
    %v232 = vand.u32 %v224, 1
    %v233 = vand.u32 %v225, 1
    %v234 = vand.u32 %v226, 1
    %v235 = vand.u32 %v227, 1
    %v236 = vand.u32 %v228, 1
    %v237 = vand.u32 %v229, 1
    %v238 = vand.u32 %v230, 1
    %vm239 = vcmp.eq.s32.totalorder %v231, 0
    %vm240 = vcmp.eq.s32.totalorder %v232, 0
    %vm241 = vcmp.eq.s32.totalorder %v233, 0
    %vm242 = vcmp.eq.s32.totalorder %v234, 0
    %vm243 = vcmp.eq.s32.totalorder %v235, 0
    %vm244 = vcmp.eq.s32.totalorder %v236, 0
    %vm245 = vcmp.eq.s32.totalorder %v237, 0
    %vm246 = vcmp.eq.s32.totalorder %v238, 0
    %v247 = vlaneseq
    %v248 = vshrl.u32 %v247, 7
    %v249 = vsub.s32 0, %v248
    %v250 = vrot.slane %v117, %v249
    %v251 = vlaneseq
    %v252 = vshrl.u32 %v251, 7
    %v253 = vsub.s32 0, %v252
    %v254 = vrot.slane %v221, %v253
    %v255 = vsel %vm239, %v250, %v254
    %v256 = vsel %vm240, %v250, %v254
    %v257 = vsel %vm241, %v250, %v254
    %v258 = vsel %vm242, %v250, %v254
    %v259 = vsel %vm243, %v250, %v254
    %v260 = vsel %vm244, %v250, %v254
    %v261 = vsel %vm245, %v250, %v254
    %v262 = vsel %vm246, %v250, %v254
    %v263 = vshra.s32 %v223, 1
    %v264 = vshra.s32 %v224, 1
    %v265 = vshra.s32 %v225, 1
    %v266 = vshra.s32 %v226, 1
    %v267 = vshra.s32 %v227, 1
    %v268 = vshra.s32 %v228, 1
    %v269 = vshra.s32 %v229, 1
    %v270 = vshra.s32 %v230, 1
    %v271 = vand.u32 %v263, 1
    %v272 = vand.u32 %v264, 1
    %v273 = vand.u32 %v265, 1
    %v274 = vand.u32 %v266, 1
    %v275 = vand.u32 %v267, 1
    %v276 = vand.u32 %v268, 1
    %v277 = vand.u32 %v269, 1
    %v278 = vand.u32 %v270, 1
    %vm279 = vcmp.eq.s32.totalorder %v271, 0
    %vm280 = vcmp.eq.s32.totalorder %v272, 0
    %vm281 = vcmp.eq.s32.totalorder %v273, 0
    %vm282 = vcmp.eq.s32.totalorder %v274, 0
    %vm283 = vcmp.eq.s32.totalorder %v275, 0
    %vm284 = vcmp.eq.s32.totalorder %v276, 0
    %vm285 = vcmp.eq.s32.totalorder %v277, 0
    %vm286 = vcmp.eq.s32.totalorder %v278, 0
    %v287 = vlaneseq
    %v288 = vshrl.u32 %v287, 7
    %v289 = vsub.s32 1, %v288
    %v290 = vrot.slane %v117, %v289
    %v291 = vlaneseq
    %v292 = vshrl.u32 %v291, 7
    %v293 = vsub.s32 1, %v292
    %v294 = vrot.slane %v221, %v293
    %v295 = vsel %vm279, %v290, %v294
    %v296 = vsel %vm280, %v290, %v294
    %v297 = vsel %vm281, %v290, %v294
    %v298 = vsel %vm282, %v290, %v294
    %v299 = vsel %vm283, %v290, %v294
    %v300 = vsel %vm284, %v290, %v294
    %v301 = vsel %vm285, %v290, %v294
    %v302 = vsel %vm286, %v290, %v294
    %v303 = vmul.f32 %v255, %v295
    %v304 = vmul.f32 %v256, %v296
    %v305 = vmul.f32 %v257, %v297
    %v306 = vmul.f32 %v258, %v298
    %v307 = vmul.f32 %v259, %v299
    %v308 = vmul.f32 %v260, %v300
    %v309 = vmul.f32 %v261, %v301
    %v310 = vmul.f32 %v262, %v302
    %v311 = vshra.s32 %v223, 2
    %v312 = vshra.s32 %v224, 2
    %v313 = vshra.s32 %v225, 2
    %v314 = vshra.s32 %v226, 2
    %v315 = vshra.s32 %v227, 2
    %v316 = vshra.s32 %v228, 2
    %v317 = vshra.s32 %v229, 2
    %v318 = vshra.s32 %v230, 2
    %v319 = vand.u32 %v311, 1
    %v320 = vand.u32 %v312, 1
    %v321 = vand.u32 %v313, 1
    %v322 = vand.u32 %v314, 1
    %v323 = vand.u32 %v315, 1
    %v324 = vand.u32 %v316, 1
    %v325 = vand.u32 %v317, 1
    %v326 = vand.u32 %v318, 1
    %vm327 = vcmp.eq.s32.totalorder %v319, 0
    %vm328 = vcmp.eq.s32.totalorder %v320, 0
    %vm329 = vcmp.eq.s32.totalorder %v321, 0
    %vm330 = vcmp.eq.s32.totalorder %v322, 0
    %vm331 = vcmp.eq.s32.totalorder %v323, 0
    %vm332 = vcmp.eq.s32.totalorder %v324, 0
    %vm333 = vcmp.eq.s32.totalorder %v325, 0
    %vm334 = vcmp.eq.s32.totalorder %v326, 0
    %v335 = vlaneseq
    %v336 = vshrl.u32 %v335, 7
    %v337 = vsub.s32 2, %v336
    %v338 = vrot.slane %v117, %v337
    %v339 = vlaneseq
    %v340 = vshrl.u32 %v339, 7
    %v341 = vsub.s32 2, %v340
    %v342 = vrot.slane %v221, %v341
    %v343 = vsel %vm327, %v338, %v342
    %v344 = vsel %vm328, %v338, %v342
    %v345 = vsel %vm329, %v338, %v342
    %v346 = vsel %vm330, %v338, %v342
    %v347 = vsel %vm331, %v338, %v342
    %v348 = vsel %vm332, %v338, %v342
    %v349 = vsel %vm333, %v338, %v342
    %v350 = vsel %vm334, %v338, %v342
    %v351 = vmul.f32 %v303, %v343
    %v352 = vmul.f32 %v304, %v344
    %v353 = vmul.f32 %v305, %v345
    %v354 = vmul.f32 %v306, %v346
    %v355 = vmul.f32 %v307, %v347
    %v356 = vmul.f32 %v308, %v348
    %v357 = vmul.f32 %v309, %v349
    %v358 = vmul.f32 %v310, %v350
    %v359 = vshra.s32 %v223, 3
    %v360 = vshra.s32 %v224, 3
    %v361 = vshra.s32 %v225, 3
    %v362 = vshra.s32 %v226, 3
    %v363 = vshra.s32 %v227, 3
    %v364 = vshra.s32 %v228, 3
    %v365 = vshra.s32 %v229, 3
    %v366 = vshra.s32 %v230, 3
    %v367 = vand.u32 %v359, 1
    %v368 = vand.u32 %v360, 1
    %v369 = vand.u32 %v361, 1
    %v370 = vand.u32 %v362, 1
    %v371 = vand.u32 %v363, 1
    %v372 = vand.u32 %v364, 1
    %v373 = vand.u32 %v365, 1
    %v374 = vand.u32 %v366, 1
    %vm375 = vcmp.eq.s32.totalorder %v367, 0
    %vm376 = vcmp.eq.s32.totalorder %v368, 0
    %vm377 = vcmp.eq.s32.totalorder %v369, 0
    %vm378 = vcmp.eq.s32.totalorder %v370, 0
    %vm379 = vcmp.eq.s32.totalorder %v371, 0
    %vm380 = vcmp.eq.s32.totalorder %v372, 0
    %vm381 = vcmp.eq.s32.totalorder %v373, 0
    %vm382 = vcmp.eq.s32.totalorder %v374, 0
    %v383 = vlaneseq
    %v384 = vshrl.u32 %v383, 7
    %v385 = vsub.s32 3, %v384
    %v386 = vrot.slane %v117, %v385
    %v387 = vlaneseq
    %v388 = vshrl.u32 %v387, 7
    %v389 = vsub.s32 3, %v388
    %v390 = vrot.slane %v221, %v389
    %v391 = vsel %vm375, %v386, %v390
    %v392 = vsel %vm376, %v386, %v390
    %v393 = vsel %vm377, %v386, %v390
    %v394 = vsel %vm378, %v386, %v390
    %v395 = vsel %vm379, %v386, %v390
    %v396 = vsel %vm380, %v386, %v390
    %v397 = vsel %vm381, %v386, %v390
    %v398 = vsel %vm382, %v386, %v390
    %v399 = vmul.f32 %v351, %v391
    %v400 = vmul.f32 %v352, %v392
    %v401 = vmul.f32 %v353, %v393
    %v402 = vmul.f32 %v354, %v394
    %v403 = vmul.f32 %v355, %v395
    %v404 = vmul.f32 %v356, %v396
    %v405 = vmul.f32 %v357, %v397
    %v406 = vmul.f32 %v358, %v398
    %v407 = vshra.s32 %v223, 4
    %v408 = vshra.s32 %v224, 4
    %v409 = vshra.s32 %v225, 4
    %v410 = vshra.s32 %v226, 4
    %v411 = vshra.s32 %v227, 4
    %v412 = vshra.s32 %v228, 4
    %v413 = vshra.s32 %v229, 4
    %v414 = vshra.s32 %v230, 4
    %v415 = vand.u32 %v407, 1
    %v416 = vand.u32 %v408, 1
    %v417 = vand.u32 %v409, 1
    %v418 = vand.u32 %v410, 1
    %v419 = vand.u32 %v411, 1
    %v420 = vand.u32 %v412, 1
    %v421 = vand.u32 %v413, 1
    %v422 = vand.u32 %v414, 1
    %vm423 = vcmp.eq.s32.totalorder %v415, 0
    %vm424 = vcmp.eq.s32.totalorder %v416, 0
    %vm425 = vcmp.eq.s32.totalorder %v417, 0
    %vm426 = vcmp.eq.s32.totalorder %v418, 0
    %vm427 = vcmp.eq.s32.totalorder %v419, 0
    %vm428 = vcmp.eq.s32.totalorder %v420, 0
    %vm429 = vcmp.eq.s32.totalorder %v421, 0
    %vm430 = vcmp.eq.s32.totalorder %v422, 0
    %v431 = vlaneseq
    %v432 = vshrl.u32 %v431, 7
    %v433 = vsub.s32 4, %v432
    %v434 = vrot.slane %v117, %v433
    %v435 = vlaneseq
    %v436 = vshrl.u32 %v435, 7
    %v437 = vsub.s32 4, %v436
    %v438 = vrot.slane %v221, %v437
    %v439 = vsel %vm423, %v434, %v438
    %v440 = vsel %vm424, %v434, %v438
    %v441 = vsel %vm425, %v434, %v438
    %v442 = vsel %vm426, %v434, %v438
    %v443 = vsel %vm427, %v434, %v438
    %v444 = vsel %vm428, %v434, %v438
    %v445 = vsel %vm429, %v434, %v438
    %v446 = vsel %vm430, %v434, %v438
    %v447 = vmul.f32 %v399, %v439
    %v448 = vmul.f32 %v400, %v440
    %v449 = vmul.f32 %v401, %v441
    %v450 = vmul.f32 %v402, %v442
    %v451 = vmul.f32 %v403, %v443
    %v452 = vmul.f32 %v404, %v444
    %v453 = vmul.f32 %v405, %v445
    %v454 = vmul.f32 %v406, %v446
    %v455 = vshra.s32 %v223, 5
    %v456 = vshra.s32 %v224, 5
    %v457 = vshra.s32 %v225, 5
    %v458 = vshra.s32 %v226, 5
    %v459 = vshra.s32 %v227, 5
    %v460 = vshra.s32 %v228, 5
    %v461 = vshra.s32 %v229, 5
    %v462 = vshra.s32 %v230, 5
    %v463 = vand.u32 %v455, 1
    %v464 = vand.u32 %v456, 1
    %v465 = vand.u32 %v457, 1
    %v466 = vand.u32 %v458, 1
    %v467 = vand.u32 %v459, 1
    %v468 = vand.u32 %v460, 1
    %v469 = vand.u32 %v461, 1
    %v470 = vand.u32 %v462, 1
    %vm471 = vcmp.eq.s32.totalorder %v463, 0
    %vm472 = vcmp.eq.s32.totalorder %v464, 0
    %vm473 = vcmp.eq.s32.totalorder %v465, 0
    %vm474 = vcmp.eq.s32.totalorder %v466, 0
    %vm475 = vcmp.eq.s32.totalorder %v467, 0
    %vm476 = vcmp.eq.s32.totalorder %v468, 0
    %vm477 = vcmp.eq.s32.totalorder %v469, 0
    %vm478 = vcmp.eq.s32.totalorder %v470, 0
    %v479 = vlaneseq
    %v480 = vshrl.u32 %v479, 7
    %v481 = vsub.s32 5, %v480
    %v482 = vrot.slane %v117, %v481
    %v483 = vlaneseq
    %v484 = vshrl.u32 %v483, 7
    %v485 = vsub.s32 5, %v484
    %v486 = vrot.slane %v221, %v485
    %v487 = vsel %vm471, %v482, %v486
    %v488 = vsel %vm472, %v482, %v486
    %v489 = vsel %vm473, %v482, %v486
    %v490 = vsel %vm474, %v482, %v486
    %v491 = vsel %vm475, %v482, %v486
    %v492 = vsel %vm476, %v482, %v486
    %v493 = vsel %vm477, %v482, %v486
    %v494 = vsel %vm478, %v482, %v486
    %v495 = vmul.f32 %v447, %v487
    %v496 = vmul.f32 %v448, %v488
    %v497 = vmul.f32 %v449, %v489
    %v498 = vmul.f32 %v450, %v490
    %v499 = vmul.f32 %v451, %v491
    %v500 = vmul.f32 %v452, %v492
    %v501 = vmul.f32 %v453, %v493
    %v502 = vmul.f32 %v454, %v494
    %v503 = vld [vmem:[%s1] sm:$0xf]
    %v504 = vld [vmem:[%s1 + $0x4] sm:$0xf]
    %v505 = vld [vmem:[%s1 + $0x8] sm:$0xf]
    %v506 = vld [vmem:[%s1 + $0xc] sm:$0xf]
    %v507 = vld [vmem:[%s1 + $0x10] sm:$0xf]
    %v508 = vld [vmem:[%s1 + $0x14] sm:$0xf]
    %v509 = vld [vmem:[%s1 + $0x18] sm:$0xf]
    %v510 = vld [vmem:[%s1 + $0x1c] sm:$0xf]
    %v511 = vld [vmem:[%s1 + $0x20] sm:$0xf]
    %v512 = vld [vmem:[%s1 + $0x24] sm:$0xf]
    %v513 = vld [vmem:[%s1 + $0x28] sm:$0xf]
    %v514 = vld [vmem:[%s1 + $0x2c] sm:$0xf]
    %v515 = vld [vmem:[%s1 + $0x30] sm:$0xf]
    %v516 = vld [vmem:[%s1 + $0x34] sm:$0xf]
    %v517 = vld [vmem:[%s1 + $0x38] sm:$0xf]
    %v518 = vld [vmem:[%s1 + $0x3c] sm:$0xf]
    %v519 = vld [vmem:[%s1 + $0x40] sm:$0xf]
    %v520 = vld [vmem:[%s1 + $0x44] sm:$0xf]
    %v521 = vld [vmem:[%s1 + $0x48] sm:$0xf]
    %v522 = vld [vmem:[%s1 + $0x4c] sm:$0xf]
    %v523 = vld [vmem:[%s1 + $0x50] sm:$0xf]
    %v524 = vld [vmem:[%s1 + $0x54] sm:$0xf]
    %v525 = vld [vmem:[%s1 + $0x58] sm:$0xf]
    %v526 = vld [vmem:[%s1 + $0x5c] sm:$0xf]
    %v527 = vld [vmem:[%s1 + $0x60] sm:$0xf]
    %v528 = vld [vmem:[%s1 + $0x64] sm:$0xf]
    %v529 = vld [vmem:[%s1 + $0x68] sm:$0xf]
    %v530 = vld [vmem:[%s1 + $0x6c] sm:$0xf]
    %v531 = vld [vmem:[%s1 + $0x70] sm:$0xf]
    %v532 = vld [vmem:[%s1 + $0x74] sm:$0xf]
    %v533 = vld [vmem:[%s1 + $0x78] sm:$0xf]
    %v534 = vld [vmem:[%s1 + $0x7c] sm:$0xf]
    %v535 = vpack.c.bf16 %v496, %v495
    %v536 = vpack.c.bf16 %v498, %v497
    %v537 = vpack.c.bf16 %v500, %v499
    %v538 = vpack.c.bf16 %v502, %v501
    %v571 = vunpack.c.l.b16 %v503
    %v572 = vunpack.c.l.b16 %v504
    %v573 = vunpack.c.l.b16 %v505
    %v574 = vunpack.c.l.b16 %v506
    %v575 = vunpack.c.l.b16 %v507
    %v576 = vunpack.c.l.b16 %v508
    %v577 = vunpack.c.l.b16 %v509
    %v578 = vunpack.c.l.b16 %v510
    %v579 = vunpack.c.l.b16 %v511
    %v580 = vunpack.c.l.b16 %v512
    %v581 = vunpack.c.l.b16 %v513
    %v582 = vunpack.c.l.b16 %v514
    %v583 = vunpack.c.l.b16 %v515
    %v584 = vunpack.c.l.b16 %v516
    %v585 = vunpack.c.l.b16 %v517
    %v586 = vunpack.c.l.b16 %v518
    %v587 = vunpack.c.l.b16 %v519
    %v588 = vunpack.c.l.b16 %v520
    %v589 = vunpack.c.l.b16 %v521
    %v590 = vunpack.c.l.b16 %v522
    %v591 = vunpack.c.l.b16 %v523
    %v592 = vunpack.c.l.b16 %v524
    %v593 = vunpack.c.l.b16 %v525
    %v594 = vunpack.c.l.b16 %v526
    %v595 = vunpack.c.l.b16 %v527
    %v596 = vunpack.c.l.b16 %v528
    %v597 = vunpack.c.l.b16 %v529
    %v598 = vunpack.c.l.b16 %v530
    %v599 = vunpack.c.l.b16 %v531
    %v600 = vunpack.c.l.b16 %v532
    %v601 = vunpack.c.l.b16 %v533
    %v602 = vunpack.c.l.b16 %v534
    %v603 = vpack.c.b16 %v572, %v571
    %v604 = vpack.c.b16 %v574, %v573
    %v605 = vpack.c.b16 %v576, %v575
    %v606 = vpack.c.b16 %v578, %v577
    %v607 = vpack.c.b16 %v580, %v579
    %v608 = vpack.c.b16 %v582, %v581
    %v609 = vpack.c.b16 %v584, %v583
    %v610 = vpack.c.b16 %v586, %v585
    %v611 = vpack.c.b16 %v588, %v587
    %v612 = vpack.c.b16 %v590, %v589
    %v613 = vpack.c.b16 %v592, %v591
    %v614 = vpack.c.b16 %v594, %v593
    %v615 = vpack.c.b16 %v596, %v595
    %v616 = vpack.c.b16 %v598, %v597
    %v617 = vpack.c.b16 %v600, %v599
    %v618 = vpack.c.b16 %v602, %v601
    %vm619 = vcmask 523264
    %v621 = vsel %vm619, %v603, 0
    %v624 = vsel %vm619, %v604, 0
    %v627 = vsel %vm619, %v605, 0
    %v630 = vsel %vm619, %v606, 0
    %v633 = vsel %vm619, %v607, 0
    %v636 = vsel %vm619, %v608, 0
    %v639 = vsel %vm619, %v609, 0
    %v642 = vsel %vm619, %v610, 0
    %v645 = vsel %vm619, %v611, 0
    %v648 = vsel %vm619, %v612, 0
    %v651 = vsel %vm619, %v613, 0
    %v654 = vsel %vm619, %v614, 0
    %v657 = vsel %vm619, %v615, 0
    %v660 = vsel %vm619, %v616, 0
    %v663 = vsel %vm619, %v617, 0
    %v666 = vsel %vm619, %v618, 0
    %668 = vmatprep.subr.bf16.mxu0 0
    %669 = vmatpush1.bf16.msra.mxu0 %v535
    %670 = vmatprep.subr.bf16.mxu0 0
    %671 = vmatpush1.bf16.msra.mxu0 %v536
    %672 = vmatprep.subr.bf16.mxu0 0
    %673 = vmatpush1.bf16.msra.mxu0 %v537
    %674 = vmatprep.subr.bf16.mxu0 0
    %675 = vmatpush1.bf16.msra.mxu0 %v538
    %676 = vmatprep.subr.bf16.mxu0 0
    %677 = vmatpush1.bf16.msra.mxu0 0
    %678 = vmatprep.subr.bf16.mxu0 0
    %679 = vmatpush1.bf16.msra.mxu0 0
    %680 = vmatprep.subr.bf16.mxu0 0
    %681 = vmatpush1.bf16.msra.mxu0 0
    %682 = vmatprep.subr.bf16.mxu0 0
    %683 = vmatpush1.bf16.msra.mxu0 0
    %684 = vmatprep.subr.bf16.mxu0 0
    %685 = vmatpush1.bf16.msra.mxu0 0
    %686 = vmatprep.subr.bf16.mxu0 0
    %687 = vmatpush1.bf16.msra.mxu0 0
    %688 = vmatprep.subr.bf16.mxu0 0
    %689 = vmatpush1.bf16.msra.mxu0 0
    %690 = vmatprep.subr.bf16.mxu0 0
    %691 = vmatpush1.bf16.msra.mxu0 0
    %692 = vmatprep.subr.bf16.mxu0 0
    %693 = vmatpush1.bf16.msra.mxu0 0
    %694 = vmatprep.subr.bf16.mxu0 0
    %695 = vmatpush1.bf16.msra.mxu0 0
    %696 = vmatprep.subr.bf16.mxu0 0
    %697 = vmatpush1.bf16.msra.mxu0 0
    %698 = vmatprep.subr.bf16.mxu0 0
    %699 = vmatpush1.bf16.msra.mxu0 0
    %700 = vmatprep.mubr.bf16.mxu0 0
    %701 = vmatmul.mubr.bf16.gmra.mrb[0].mxu0 %v621
    %v702 = vpop.f32.mrb[0].mxu0
    %v703 = vadd.f32 0.0, %v702
    %v704 = vpop.f32.mrb[0].mxu0
    %v705 = vpop.f32.mrb[0].mxu0
    %v706 = vadd.f32 0.0, %v705
    %v707 = vpop.f32.mrb[0].mxu0
    %708 = vmatprep.mubr.bf16.mxu0 0
    %709 = vmatmul.mubr.bf16.gmra.mrb[0].mxu0 %v624
    %v710 = vpop.f32.mrb[0].mxu0
    %v711 = vadd.f32 0.0, %v710
    %v712 = vpop.f32.mrb[0].mxu0
    %v713 = vpop.f32.mrb[0].mxu0
    %v714 = vadd.f32 0.0, %v713
    %v715 = vpop.f32.mrb[0].mxu0
    %716 = vmatprep.mubr.bf16.mxu0 0
    %717 = vmatmul.mubr.bf16.gmra.mrb[0].mxu0 %v627
    %v718 = vpop.f32.mrb[0].mxu0
    %v719 = vadd.f32 0.0, %v718
    %v720 = vpop.f32.mrb[0].mxu0
    %v721 = vpop.f32.mrb[0].mxu0
    %v722 = vadd.f32 0.0, %v721
    %v723 = vpop.f32.mrb[0].mxu0
    %724 = vmatprep.mubr.bf16.mxu0 0
    %725 = vmatmul.mubr.bf16.gmra.mrb[0].mxu0 %v630
    %v726 = vpop.f32.mrb[0].mxu0
    %v727 = vadd.f32 0.0, %v726
    %v728 = vpop.f32.mrb[0].mxu0
    %v729 = vpop.f32.mrb[0].mxu0
    %v730 = vadd.f32 0.0, %v729
    %v731 = vpop.f32.mrb[0].mxu0
    %732 = vmatprep.mubr.bf16.mxu0 0
    %733 = vmatmul.mubr.bf16.gmra.mrb[0].mxu0 %v633
    %v734 = vpop.f32.mrb[0].mxu0
    %v735 = vadd.f32 0.0, %v734
    %v736 = vpop.f32.mrb[0].mxu0
    %v737 = vpop.f32.mrb[0].mxu0
    %v738 = vadd.f32 0.0, %v737
    %v739 = vpop.f32.mrb[0].mxu0
    %740 = vmatprep.mubr.bf16.mxu0 0
    %741 = vmatmul.mubr.bf16.gmra.mrb[0].mxu0 %v636
    %v742 = vpop.f32.mrb[0].mxu0
    %v743 = vadd.f32 0.0, %v742
    %v744 = vpop.f32.mrb[0].mxu0
    %v745 = vpop.f32.mrb[0].mxu0
    %v746 = vadd.f32 0.0, %v745
    %v747 = vpop.f32.mrb[0].mxu0
    %748 = vmatprep.mubr.bf16.mxu0 0
    %749 = vmatmul.mubr.bf16.gmra.mrb[0].mxu0 %v639
    %v750 = vpop.f32.mrb[0].mxu0
    %v751 = vadd.f32 0.0, %v750
    %v752 = vpop.f32.mrb[0].mxu0
    %v753 = vpop.f32.mrb[0].mxu0
    %v754 = vadd.f32 0.0, %v753
    %v755 = vpop.f32.mrb[0].mxu0
    %756 = vmatprep.mubr.bf16.mxu0 0
    %757 = vmatmul.mubr.bf16.gmra.mrb[0].mxu0 %v642
    %v758 = vpop.f32.mrb[0].mxu0
    %v759 = vadd.f32 0.0, %v758
    %v760 = vpop.f32.mrb[0].mxu0
    %v761 = vpop.f32.mrb[0].mxu0
    %v762 = vadd.f32 0.0, %v761
    %v763 = vpop.f32.mrb[0].mxu0
    %764 = vmatprep.mubr.bf16.mxu0 0
    %765 = vmatmul.mubr.bf16.gmra.mrb[0].mxu0 %v645
    %v766 = vpop.f32.mrb[0].mxu0
    %v767 = vadd.f32 0.0, %v766
    %v768 = vpop.f32.mrb[0].mxu0
    %v769 = vpop.f32.mrb[0].mxu0
    %v770 = vadd.f32 0.0, %v769
    %v771 = vpop.f32.mrb[0].mxu0
    %772 = vmatprep.mubr.bf16.mxu0 0
    %773 = vmatmul.mubr.bf16.gmra.mrb[0].mxu0 %v648
    %v774 = vpop.f32.mrb[0].mxu0
    %v775 = vadd.f32 0.0, %v774
    %v776 = vpop.f32.mrb[0].mxu0
    %v777 = vpop.f32.mrb[0].mxu0
    %v778 = vadd.f32 0.0, %v777
    %v779 = vpop.f32.mrb[0].mxu0
    %780 = vmatprep.mubr.bf16.mxu0 0
    %781 = vmatmul.mubr.bf16.gmra.mrb[0].mxu0 %v651
    %v782 = vpop.f32.mrb[0].mxu0
    %v783 = vadd.f32 0.0, %v782
    %v784 = vpop.f32.mrb[0].mxu0
    %v785 = vpop.f32.mrb[0].mxu0
    %v786 = vadd.f32 0.0, %v785
    %v787 = vpop.f32.mrb[0].mxu0
    %788 = vmatprep.mubr.bf16.mxu0 0
    %789 = vmatmul.mubr.bf16.gmra.mrb[0].mxu0 %v654
    %v790 = vpop.f32.mrb[0].mxu0
    %v791 = vadd.f32 0.0, %v790
    %v792 = vpop.f32.mrb[0].mxu0
    %v793 = vpop.f32.mrb[0].mxu0
    %v794 = vadd.f32 0.0, %v793
    %v795 = vpop.f32.mrb[0].mxu0
    %796 = vmatprep.mubr.bf16.mxu0 0
    %797 = vmatmul.mubr.bf16.gmra.mrb[0].mxu0 %v657
    %v798 = vpop.f32.mrb[0].mxu0
    %v799 = vadd.f32 0.0, %v798
    %v800 = vpop.f32.mrb[0].mxu0
    %v801 = vpop.f32.mrb[0].mxu0
    %v802 = vadd.f32 0.0, %v801
    %v803 = vpop.f32.mrb[0].mxu0
    %804 = vmatprep.mubr.bf16.mxu0 0
    %805 = vmatmul.mubr.bf16.gmra.mrb[0].mxu0 %v660
    %v806 = vpop.f32.mrb[0].mxu0
    %v807 = vadd.f32 0.0, %v806
    %v808 = vpop.f32.mrb[0].mxu0
    %v809 = vpop.f32.mrb[0].mxu0
    %v810 = vadd.f32 0.0, %v809
    %v811 = vpop.f32.mrb[0].mxu0
    %812 = vmatprep.mubr.bf16.mxu0 0
    %813 = vmatmul.mubr.bf16.gmra.mrb[0].mxu0 %v663
    %v814 = vpop.f32.mrb[0].mxu0
    %v815 = vadd.f32 0.0, %v814
    %v816 = vpop.f32.mrb[0].mxu0
    %v817 = vpop.f32.mrb[0].mxu0
    %v818 = vadd.f32 0.0, %v817
    %v819 = vpop.f32.mrb[0].mxu0
    %820 = vmatprep.mubr.bf16.mxu0 0
    %821 = vmatmul.mubr.bf16.gmra.mrb[0].mxu0 %v666
    %v822 = vpop.f32.mrb[0].mxu0
    %v823 = vadd.f32 0.0, %v822
    %v824 = vpop.f32.mrb[0].mxu0
    %v825 = vpop.f32.mrb[0].mxu0
    %v826 = vadd.f32 0.0, %v825
    %v827 = vpop.f32.mrb[0].mxu0
    %828 = vdwg.mxu0
    %v829 = vmul.f32 %v703, %v495
    %v830 = vmul.f32 %v706, %v496
    %v831 = vmul.f32 %v711, %v497
    %v832 = vmul.f32 %v714, %v498
    %v833 = vmul.f32 %v719, %v499
    %v834 = vmul.f32 %v722, %v500
    %v835 = vmul.f32 %v727, %v501
    %v836 = vmul.f32 %v730, %v502
    %v837 = vadd.f32 %v829, %v830
    %v838 = vadd.f32 %v837, %v831
    %v839 = vadd.f32 %v838, %v832
    %v840 = vadd.f32 %v839, %v833
    %v841 = vadd.f32 %v840, %v834
    %v842 = vadd.f32 %v841, %v835
    %v843 = vadd.f32 %v842, %v836
    %v844 = vrot.slane %v843, 4
    %v845 = vadd.f32 %v843, %v844
    %v846 = vrot.slane %v845, 2
    %v847 = vadd.f32 %v845, %v846
    %v848 = vrot.slane %v847, 1
    %v849 = vadd.f32 %v847, %v848
    %850 = vst [vmem:[#allocation2] sm:$0x1] %v849
    %v851 = vmul.f32 %v735, %v495
    %v852 = vmul.f32 %v738, %v496
    %v853 = vmul.f32 %v743, %v497
    %v854 = vmul.f32 %v746, %v498
    %v855 = vmul.f32 %v751, %v499
    %v856 = vmul.f32 %v754, %v500
    %v857 = vmul.f32 %v759, %v501
    %v858 = vmul.f32 %v762, %v502
    %v859 = vadd.f32 %v851, %v852
    %v860 = vadd.f32 %v859, %v853
    %v861 = vadd.f32 %v860, %v854
    %v862 = vadd.f32 %v861, %v855
    %v863 = vadd.f32 %v862, %v856
    %v864 = vadd.f32 %v863, %v857
    %v865 = vadd.f32 %v864, %v858
    %v866 = vrot.slane %v865, 4
    %v867 = vadd.f32 %v865, %v866
    %v868 = vrot.slane %v867, 2
    %v869 = vadd.f32 %v867, %v868
    %v870 = vrot.slane %v869, 1
    %v871 = vadd.f32 %v869, %v870
    %872 = vst [vmem:[#allocation2 + $0x1] sm:$0x1] %v871
    %v873 = vmul.f32 %v767, %v495
    %v874 = vmul.f32 %v770, %v496
    %v875 = vmul.f32 %v775, %v497
    %v876 = vmul.f32 %v778, %v498
    %v877 = vmul.f32 %v783, %v499
    %v878 = vmul.f32 %v786, %v500
    %v879 = vmul.f32 %v791, %v501
    %v880 = vmul.f32 %v794, %v502
    %v881 = vadd.f32 %v873, %v874
    %v882 = vadd.f32 %v881, %v875
    %v883 = vadd.f32 %v882, %v876
    %v884 = vadd.f32 %v883, %v877
    %v885 = vadd.f32 %v884, %v878
    %v886 = vadd.f32 %v885, %v879
    %v887 = vadd.f32 %v886, %v880
    %v888 = vrot.slane %v887, 4
    %v889 = vadd.f32 %v887, %v888
    %v890 = vrot.slane %v889, 2
    %v891 = vadd.f32 %v889, %v890
    %v892 = vrot.slane %v891, 1
    %v893 = vadd.f32 %v891, %v892
    %894 = vst [vmem:[#allocation2 + $0x2] sm:$0x1] %v893
    %v895 = vmul.f32 %v799, %v495
    %v896 = vmul.f32 %v802, %v496
    %v897 = vmul.f32 %v807, %v497
    %v898 = vmul.f32 %v810, %v498
    %v899 = vmul.f32 %v815, %v499
    %v900 = vmul.f32 %v818, %v500
    %v901 = vmul.f32 %v823, %v501
    %v902 = vmul.f32 %v826, %v502
    %v903 = vadd.f32 %v895, %v896
    %v904 = vadd.f32 %v903, %v897
    %v905 = vadd.f32 %v904, %v898
    %v906 = vadd.f32 %v905, %v899
    %v907 = vadd.f32 %v906, %v900
    %v908 = vadd.f32 %v907, %v901
    %v909 = vadd.f32 %v908, %v902
    %v910 = vrot.slane %v909, 4
    %v911 = vadd.f32 %v909, %v910
    %v912 = vrot.slane %v911, 2
    %v913 = vadd.f32 %v911, %v912
    %v914 = vrot.slane %v913, 1
    %v915 = vadd.f32 %v913, %v914
    %916 = vst [vmem:[#allocation2 + $0x3] sm:$0x1] %v915
    // Predicated region
    $region10: #{tpu_custom_call.1} parent=1 // pred_check
      _
    $region11: #{tpu_custom_call.1} parent=1 // pred_check_branch
      %918 = sbr.rel (0) target = $region13
    $region12: #{tpu_custom_call.1} parent=1 // pred_region
      %s920 = ssub.s32 64, 64
      %921 = vsyncadd [#allocation3], %s920
      %s923 = sshll.u32 [#allocation2], 4
      %s924 = int_to_ptr.vmem [resolvable:$true] %s923
      %926 = dma.vmem_to_hbm [thread:$0]  %s924, 64, %s2, [#allocation3]
    $region13: #{tpu_custom_call.1} parent=1 // pred_fallthru
      _
    // Predicated region
    $region14: #{tpu_custom_call.1} parent=1 // pred_check
      _
    $region15: #{tpu_custom_call.1} parent=1 // pred_check_branch
      %928 = sbr.rel (0) target = $region17
    $region16: #{tpu_custom_call.1} parent=1 // pred_region
      %929 = dma.done [#allocation3], 64
    $region17: #{tpu_custom_call.1} parent=1 // pred_fallthru
      _
    %930 = vsyncpa [#allocation3], 1

</llo_original>
